<compile_context>
chip_gen: v6e
topology: v6e:2x2x1
jax: 0.10.0
libtpu: 0.0.40
codegen_flags: <defaults>
</compile_context>

<pallas_src>
import functools

import jax
import jax.numpy as jnp
from jax import lax
from jax.experimental import pallas as pl
from jax.experimental.pallas import tpu as pltpu


_LANE = 128            # lane width; padding granularity for ab (rows of f / dims of G)
_TK_TARGET = 2048      # K-tile width (columns of f per grid step); fits all generations


def _round_up(n, m):
    return ((n + m - 1) // m) * m


def _prep_features(x, compute_dtype, tk_target=_TK_TARGET):
    """NCHW -> zero-padded (ab_p, cd_p) feature slab in the MXU feed dtype."""
    a, b, c, d = x.shape
    ab, cd = a * b, c * d
    ab_p = _round_up(ab, _LANE)            # lane-dense G output / full MXU rows
    cd_p = _round_up(cd, _LANE)
    if cd_p > tk_target:
        tk = tk_target
        cd_p = _round_up(cd, tk)           # last K tile zero-padded, never partial
    else:
        tk = cd_p                          # single K step
    f = x.reshape(ab, cd)
    f = jnp.pad(f, ((0, ab_p - ab), (0, cd_p - cd)))
    return f.astype(compute_dtype), ab, cd, ab_p, cd_p, tk


def _vmem_limit_bytes(ab_p, tk, itemsize):
    # double-buffered f tile + fp32 accumulator + target + output (with 2x margin),
    # capped below v7x's 64 MiB physical VMEM.
    est = 2 * ab_p * tk * itemsize + 3 * ab_p * ab_p * 4 + (1 << 20)
    return int(min(max(2 * est, 32 << 20), 48 << 20))


def _compiler_params(ab_p, tk, itemsize):
    return pltpu.CompilerParams(
        dimension_semantics=("arbitrary",),            # K is a reduction axis
        vmem_limit_bytes=_vmem_limit_bytes(ab_p, tk, itemsize),
    )


# ---------------------------------------------------------------------------
# Kernels
# ---------------------------------------------------------------------------

def _gram_kernel(f_ref, g_ref, acc_ref, *, inv_denom):
    """K-tiled G = (f @ f.T) * inv_denom with an fp32 VMEM accumulator."""
    k = pl.program_id(0)

    @pl.when(k == 0)
    def _():
        acc_ref[...] = jnp.zeros_like(acc_ref)

    f = f_ref[...]                                      # (ab_p, tk) bf16 tile
    acc_ref[...] += lax.dot_general(                    # transpose-free f @ f.T
        f, f,
        dimension_numbers=(((1,), (1,)), ((), ())),
        preferred_element_type=jnp.float32,
    )

    @pl.when(k == pl.num_programs(0) - 1)
    def _():
        g_ref[...] = acc_ref[...] * inv_denom           # fp32 epilogue


def _style_loss_kernel(f_ref, t_ref, loss_ref, acc_ref, *, inv_denom, inv_mse):
    """Fused: K-tiled Gram of f, then MSE against the target Gram (loss only)."""
    k = pl.program_id(0)

    @pl.when(k == 0)
    def _():
        acc_ref[...] = jnp.zeros_like(acc_ref)

    f = f_ref[...]                                      # (ab_p, tk) bf16 tile
    acc_ref[...] += lax.dot_general(
        f, f,
        dimension_numbers=(((1,), (1,)), ((), ())),
        preferred_element_type=jnp.float32,
    )

    @pl.when(k == pl.num_programs(0) - 1)
    def _():
        diff = acc_ref[...] * inv_denom - t_ref[...]    # fp32 epilogue; padded diffs == 0
        loss_ref[...] = jnp.broadcast_to(jnp.sum(diff * diff) * inv_mse, (1, 1))


# ---------------------------------------------------------------------------
# Wrappers
# ---------------------------------------------------------------------------

def _gram_padded(x, *, compute_dtype=jnp.bfloat16):
    """Padded Gram matrix (ab_p, ab_p) fp32; padded rows/cols are exactly zero."""
    f, ab, cd, ab_p, cd_p, tk = _prep_features(x, compute_dtype)
    nk = cd_p // tk
    inv_denom = 1.0 / float(ab * cd)                    # true a*b*c*d (unpadded)
    kernel = functools.partial(_gram_kernel, inv_denom=inv_denom)
    g = pl.pallas_call(
        kernel,
        grid_spec=pltpu.PrefetchScalarGridSpec(
            num_scalar_prefetch=0,
            grid=(nk,),
            in_specs=[pl.BlockSpec((ab_p, tk), lambda k: (0, k))],
            out_specs=pl.BlockSpec((ab_p, ab_p), lambda k: (0, 0)),
            scratch_shapes=[pltpu.VMEM((ab_p, ab_p), jnp.float32)],
        ),
        out_shape=jax.ShapeDtypeStruct((ab_p, ab_p), jnp.float32),
        compiler_params=_compiler_params(ab_p, tk, jnp.dtype(compute_dtype).itemsize),
    )(f)
    return g, ab


def gram_matrix(x, *, compute_dtype=jnp.bfloat16):
    """Pallas version of the PyTorch gram_matrix (x is NCHW); returns (a*b, a*b)."""
    g, ab = _gram_padded(x, compute_dtype=compute_dtype)
    return g[:ab, :ab]


class StyleLoss:
    """Mirrors the PyTorch StyleLoss module: stores the target Gram; forward
    computes self.loss = mse(gram(input), target) and returns input unchanged."""

    def __init__(self, target_feature, *, compute_dtype=jnp.bfloat16):
        self._compute_dtype = compute_dtype
        g_pad, ab = _gram_padded(target_feature, compute_dtype=compute_dtype)
        self._target_padded = g_pad                     # (ab_p, ab_p) fp32 detached const
        self._ab = ab
        self.target = g_pad[:ab, :ab]                   # API parity with PyTorch module
        self.loss = None

    def __call__(self, x):
        f, ab, cd, ab_p, cd_p, tk = _prep_features(x, self._compute_dtype)
        assert ab == self._ab and ab_p == self._target_padded.shape[0], (
            "input feature batch*channel count must match the target feature")
        nk = cd_p // tk
        inv_denom = 1.0 / float(ab * cd)                # true a*b*c*d (unpadded)
        inv_mse = 1.0 / float(ab * ab)                  # MSE over the real (ab, ab) block
        kernel = functools.partial(
            _style_loss_kernel, inv_denom=inv_denom, inv_mse=inv_mse)
        loss = pl.pallas_call(
            kernel,
            grid_spec=pltpu.PrefetchScalarGridSpec(
                num_scalar_prefetch=0,
                grid=(nk,),
                in_specs=[
                    pl.BlockSpec((ab_p, tk), lambda k: (0, k)),    # f K-tiles (pipelined)
                    pl.BlockSpec((ab_p, ab_p), lambda k: (0, 0)),  # target Gram (resident)
                ],
                out_specs=pl.BlockSpec((1, 1), lambda k: (0, 0)),
                scratch_shapes=[pltpu.VMEM((ab_p, ab_p), jnp.float32)],
            ),
            out_shape=jax.ShapeDtypeStruct((1, 1), jnp.float32),
            compiler_params=_compiler_params(
                ab_p, tk, jnp.dtype(self._compute_dtype).itemsize),
        )(f, self._target_padded)
        self.loss = loss[0, 0]
        # TODO(synk): only the forward pass is implemented; no autograd/backward
        # through the stored loss (PyTorch relies on nn.Module autograd for that).
        return x                                        # forward returns input unchanged


if __name__ == "__main__":
    key = jax.random.PRNGKey(0)
    k_t, k_x = jax.random.split(key)

    # small NCHW conv-feature shapes consistent with the module
    a, b, c, d = 2, 4, 16, 16
    target_feature = jax.random.normal(k_t, (a, b, c, d), dtype=jnp.float32)
    x = jax.random.normal(k_x, (a, b, c, d), dtype=jnp.float32)

    style = StyleLoss(target_feature)
    out = style(x)

    out = jax.block_until_ready(out)
    loss = jax.block_until_ready(style.loss)
    G = jax.block_until_ready(gram_matrix(x))

    # pure-JAX references
    def ref_gram(t, cast_bf16):
        f = t.reshape(a * b, c * d)
        if cast_bf16:
            f = f.astype(jnp.bfloat16)
        g = lax.dot_general(f, f, dimension_numbers=(((1,), (1,)), ((), ())),
                            preferred_element_type=jnp.float32)
        return g / float(a * b * c * d)

    # same-precision reference (bf16 MXU operands, fp32 accumulation) -- tight check
    G16 = ref_gram(x, True)
    T16 = ref_gram(target_feature, True)
    loss16 = jnp.mean((G16 - T16) ** 2)
    # full fp32 reference -- loose check (only bf16 quantization of the MXU feed differs)
    G32 = ref_gram(x, False)
    T32 = ref_gram(target_feature, False)
    loss32 = jnp.mean((G32 - T32) ** 2)

    assert out.shape == x.shape and jnp.allclose(out, x)
    assert jnp.allclose(G, G16, rtol=1e-5, atol=1e-6)
    assert jnp.allclose(G, G32, rtol=5e-2, atol=1e-3)
    assert jnp.allclose(loss, loss16, rtol=1e-3, atol=1e-8)
    assert jnp.allclose(loss, loss32, rtol=5e-2, atol=1e-7)

    print("KERNEL_OK")
</pallas_src>

<mosaic_0001>
module attributes {stable_mosaic.version = 11 : i64} {
  func.func @_gram_kernel(%arg0: i32, %arg1: memref<128x256xbf16, #tpu.memory_space<vmem>>, %arg2: memref<128x128xf32, #tpu.memory_space<vmem>>, %arg3: memref<128x128xf32, #tpu.memory_space<vmem>>) attributes {dimension_semantics = [#tpu.dimension_semantics<arbitrary>], iteration_bounds = array<i64: 1>, scalar_prefetch = 0 : i64, scratch_operands = 1 : i64, tpu.core_type = #tpu.core_type<tc>, window_params = [{transform_indices = @transform_0, window_bounds = array<i64: 128, 256>}, {pipeline_mode = #tpu.pipeline_mode<synchronous>, transform_indices = @transform_1, window_bounds = array<i64: 128, 128>}]} {
    %c0_i32 = arith.constant 0 : i32
    %0 = arith.cmpi eq, %arg0, %c0_i32 : i32
    %1 = arith.extui %0 : i1 to i32
    %c0_i32_0 = arith.constant 0 : i32
    %2 = arith.cmpi ne, %1, %c0_i32_0 : i32
    scf.if %2 {
      %cst_8 = arith.constant 0.000000e+00 : f32
      %11 = vector.broadcast %cst_8 : f32 to vector<128x128xf32>
      %c0_9 = arith.constant 0 : index
      %c0_10 = arith.constant 0 : index
      %12 = vector.load %arg3[%c0_9, %c0_10] : memref<128x128xf32, #tpu.memory_space<vmem>>, vector<128x128xf32>
      tpu.vector_store %arg3[%c0_9, %c0_10], %11 {strides = array<i32>} : memref<128x128xf32, #tpu.memory_space<vmem>>, vector<128x128xf32>,
    } else {
    }
    %c0 = arith.constant 0 : index
    %c0_1 = arith.constant 0 : index
    %3 = vector.load %arg1[%c0, %c0_1] : memref<128x256xbf16, #tpu.memory_space<vmem>>, vector<128x256xbf16>
    %c0_2 = arith.constant 0 : index
    %c0_3 = arith.constant 0 : index
    %4 = vector.load %arg3[%c0_2, %c0_3] : memref<128x128xf32, #tpu.memory_space<vmem>>, vector<128x128xf32>
    %cst = arith.constant dense<0.000000e+00> : vector<128x128xf32>
    %5 = tpu.matmul %3, %3, %cst {dimension_numbers = #tpu.dot_dimension_numbers<[1], [1], [0], [0], [0, 0, 1, 0], [], []>} : vector<128x256xbf16>, vector<128x256xbf16>, vector<128x128xf32> -> vector<128x128xf32>
    %6 = arith.addf %4, %5 : vector<128x128xf32>
    %c0_4 = arith.constant 0 : index
    %c0_5 = arith.constant 0 : index
    %7 = vector.load %arg3[%c0_4, %c0_5] : memref<128x128xf32, #tpu.memory_space<vmem>>, vector<128x128xf32>
    tpu.vector_store %arg3[%c0_4, %c0_5], %6 {strides = array<i32>} : memref<128x128xf32, #tpu.memory_space<vmem>>, vector<128x128xf32>,
    %c0_i32_6 = arith.constant 0 : i32
    %8 = arith.cmpi eq, %arg0, %c0_i32_6 : i32
    %9 = arith.extui %8 : i1 to i32
    %c0_i32_7 = arith.constant 0 : i32
    %10 = arith.cmpi ne, %9, %c0_i32_7 : i32
    scf.if %10 {
      %c0_8 = arith.constant 0 : index
      %c0_9 = arith.constant 0 : index
      %11 = vector.load %arg3[%c0_8, %c0_9] : memref<128x128xf32, #tpu.memory_space<vmem>>, vector<128x128xf32>
      %cst_10 = arith.constant 4.8828125E-4 : f32
      %12 = vector.broadcast %cst_10 : f32 to vector<128x128xf32>
      %13 = arith.mulf %11, %12 : vector<128x128xf32>
      %c0_11 = arith.constant 0 : index
      %c0_12 = arith.constant 0 : index
      %14 = vector.load %arg2[%c0_11, %c0_12] : memref<128x128xf32, #tpu.memory_space<vmem>>, vector<128x128xf32>
      tpu.vector_store %arg2[%c0_11, %c0_12], %13 {strides = array<i32>} : memref<128x128xf32, #tpu.memory_space<vmem>>, vector<128x128xf32>,
    } else {
    }
    return
  }
  func.func @transform_0(%arg0: i32) -> (i32, i32) {
    %c0_i32 = arith.constant 0 : i32
    %c0_i32_0 = arith.constant 0 : i32
    return %c0_i32, %arg0 : i32, i32
  }
  func.func @transform_1(%arg0: i32) -> (i32, i32) {
    %c0_i32 = arith.constant 0 : i32
    %c0_i32_0 = arith.constant 0 : i32
    %c0_i32_1 = arith.constant 0 : i32
    return %c0_i32, %c0_i32_0 : i32, i32
  }
}

</mosaic_0001>

<llo_original>
// kernel: tpu_custom_call.1
$region0: #{tpu_custom_call.1}
  #allocation0 [shape = 'u32[]', space=smem, size = 0x4, offset = 0x4, fixed_abs, tag = 'smem constant byte address 0x4 - core index']
  #allocation1 [shape = 'u32[144,128]{1,0:T(1,128)}', space=vmem, size = 0x12000, scoped, tag = 'internal scratch']
  #allocation2 [shape = 'f32[128,128]{1,0:T(8,128)}', space=vmem, size = 0x10000, scoped, tag = 'scratch operand']
  %s0 = inlined_call_operand.hbm [shape: bf16[128,256], index: 0, kind: input, shape index: {}]
  %s1 = inlined_call_operand.hbm [shape: f32[128,128], index: 1, kind: output, shape index: {}]
  %s2 = sld [smem:[#allocation0]]
  $region26: #{tpu_custom_call.1} parent=0
    _
  %s4 = ssub.s32 1, %s2
  %s5 = scalar_select 0, %s4, %s2
  $region1: #{tpu_custom_call.1} parent=0
    #allocation3 [shape = 'u8[65536]{0}', space=vmem, size = 0x10000, scoped, tag = 'input window, operand 0, single buffered']
    #allocation4 [shape = 's32[1]{0}', space=sflag, size = 0x4, scoped, tag = 'scoped memory for tpu_custom_call.1']
    #allocation5 [shape = 's32[1]{0}', space=sflag, size = 0x4, scoped, tag = 'scoped memory for tpu_custom_call.1']
    #allocation6 [shape = 'u8[65536]{0}', space=vmem, size = 0x10000, scoped, tag = 'output window, operand 0, single buffered']
    %6 = vsyncpa [#allocation4], 0
    %7 = vsyncpa [#allocation5], 0
    // Predicated region
    $region2: #{tpu_custom_call.1} parent=1 // pred_check
      _
    $region3: #{tpu_custom_call.1} parent=1 // pred_check_branch
      %9 = sbr.rel (0) target = $region5
    $region4: #{tpu_custom_call.1} parent=1 // pred_region
      %s11 = ssub.s32 2048, 2048
      %12 = vsyncadd [#allocation4], %s11
      %s13 = sshll.u32 [#allocation3], 4
      %s14 = int_to_ptr.vmem [resolvable:$true] %s13
      %19 = dma.hbm_to_vmem [thread:$0]  %s0, 2048, %s14, [#allocation4], 128, 128, 8
    $region5: #{tpu_custom_call.1} parent=1 // pred_fallthru
      _
    // Predicated region
    $region6: #{tpu_custom_call.1} parent=1 // pred_check
      _
    $region7: #{tpu_custom_call.1} parent=1 // pred_check_branch
      %21 = sbr.rel (0) target = $region9
    $region8: #{tpu_custom_call.1} parent=1 // pred_region
      %22 = dma.done [#allocation4], 2048
    $region9: #{tpu_custom_call.1} parent=1 // pred_fallthru
      _
    %p24 = scmp.eq.s32.totalorder 0, 0
    // Predicated region
    $region10: #{tpu_custom_call.1} parent=1 // pred_check
      %p25 = pneg %p24
    $region11: #{tpu_custom_call.1} parent=1 // pred_check_branch
      %27 = sbr.rel (%p25) target = $region13
    $region12: #{tpu_custom_call.1} parent=1 // pred_region
      %28 = vst [vmem:[#allocation2] sm:$0xff] 0.0
      %29 = vst [vmem:[#allocation2 + $0x8] sm:$0xff] 0.0
      %30 = vst [vmem:[#allocation2 + $0x10] sm:$0xff] 0.0
      %31 = vst [vmem:[#allocation2 + $0x18] sm:$0xff] 0.0
      %32 = vst [vmem:[#allocation2 + $0x20] sm:$0xff] 0.0
      %33 = vst [vmem:[#allocation2 + $0x28] sm:$0xff] 0.0
      %34 = vst [vmem:[#allocation2 + $0x30] sm:$0xff] 0.0
      %35 = vst [vmem:[#allocation2 + $0x38] sm:$0xff] 0.0
      %36 = vst [vmem:[#allocation2 + $0x40] sm:$0xff] 0.0
      %37 = vst [vmem:[#allocation2 + $0x48] sm:$0xff] 0.0
      %38 = vst [vmem:[#allocation2 + $0x50] sm:$0xff] 0.0
      %39 = vst [vmem:[#allocation2 + $0x58] sm:$0xff] 0.0
      %40 = vst [vmem:[#allocation2 + $0x60] sm:$0xff] 0.0
      %41 = vst [vmem:[#allocation2 + $0x68] sm:$0xff] 0.0
      %42 = vst [vmem:[#allocation2 + $0x70] sm:$0xff] 0.0
      %43 = vst [vmem:[#allocation2 + $0x78] sm:$0xff] 0.0
    $region13: #{tpu_custom_call.1} parent=1 // pred_fallthru
      _
    %v44 = vld [vmem:[#allocation3] sm:$0xff]
    %v45 = vld [vmem:[#allocation3 + $0x8] sm:$0xff]
    %v46 = vld [vmem:[#allocation3 + $0x10] sm:$0xff]
    %v47 = vld [vmem:[#allocation3 + $0x18] sm:$0xff]
    %v48 = vld [vmem:[#allocation3 + $0x20] sm:$0xff]
    %v49 = vld [vmem:[#allocation3 + $0x28] sm:$0xff]
    %v50 = vld [vmem:[#allocation3 + $0x30] sm:$0xff]
    %v51 = vld [vmem:[#allocation3 + $0x38] sm:$0xff]
    %v52 = vld [vmem:[#allocation3 + $0x40] sm:$0xff]
    %v53 = vld [vmem:[#allocation3 + $0x48] sm:$0xff]
    %v54 = vld [vmem:[#allocation3 + $0x50] sm:$0xff]
    %v55 = vld [vmem:[#allocation3 + $0x58] sm:$0xff]
    %v56 = vld [vmem:[#allocation3 + $0x60] sm:$0xff]
    %v57 = vld [vmem:[#allocation3 + $0x68] sm:$0xff]
    %v58 = vld [vmem:[#allocation3 + $0x70] sm:$0xff]
    %v59 = vld [vmem:[#allocation3 + $0x78] sm:$0xff]
    %v60 = vld [vmem:[#allocation2] sm:$0xff]
    %v61 = vld [vmem:[#allocation2 + $0x8] sm:$0xff]
    %v62 = vld [vmem:[#allocation2 + $0x10] sm:$0xff]
    %v63 = vld [vmem:[#allocation2 + $0x18] sm:$0xff]
    %v64 = vld [vmem:[#allocation2 + $0x20] sm:$0xff]
    %v65 = vld [vmem:[#allocation2 + $0x28] sm:$0xff]
    %v66 = vld [vmem:[#allocation2 + $0x30] sm:$0xff]
    %v67 = vld [vmem:[#allocation2 + $0x38] sm:$0xff]
    %v68 = vld [vmem:[#allocation2 + $0x40] sm:$0xff]
    %v69 = vld [vmem:[#allocation2 + $0x48] sm:$0xff]
    %v70 = vld [vmem:[#allocation2 + $0x50] sm:$0xff]
    %v71 = vld [vmem:[#allocation2 + $0x58] sm:$0xff]
    %v72 = vld [vmem:[#allocation2 + $0x60] sm:$0xff]
    %v73 = vld [vmem:[#allocation2 + $0x68] sm:$0xff]
    %v74 = vld [vmem:[#allocation2 + $0x70] sm:$0xff]
    %v75 = vld [vmem:[#allocation2 + $0x78] sm:$0xff]
    %v92 = vunpack.c.l.b16 %v44
    %v93 = vunpack.c.h.b16 %v44
    %v94 = vunpack.c.l.b16 %v45
    %v95 = vunpack.c.h.b16 %v45
    %v96 = vunpack.c.l.b16 %v46
    %v97 = vunpack.c.h.b16 %v46
    %v98 = vunpack.c.l.b16 %v47
    %v99 = vunpack.c.h.b16 %v47
    %v100 = vunpack.c.l.b16 %v48
    %v101 = vunpack.c.h.b16 %v48
    %v102 = vunpack.c.l.b16 %v49
    %v103 = vunpack.c.h.b16 %v49
    %v104 = vunpack.c.l.b16 %v50
    %v105 = vunpack.c.h.b16 %v50
    %v106 = vunpack.c.l.b16 %v51
    %v107 = vunpack.c.h.b16 %v51
    %v108 = vunpack.c.l.b16 %v52
    %v109 = vunpack.c.h.b16 %v52
    %v110 = vunpack.c.l.b16 %v53
    %v111 = vunpack.c.h.b16 %v53
    %v112 = vunpack.c.l.b16 %v54
    %v113 = vunpack.c.h.b16 %v54
    %v114 = vunpack.c.l.b16 %v55
    %v115 = vunpack.c.h.b16 %v55
    %v116 = vunpack.c.l.b16 %v56
    %v117 = vunpack.c.h.b16 %v56
    %v118 = vunpack.c.l.b16 %v57
    %v119 = vunpack.c.h.b16 %v57
    %v120 = vunpack.c.l.b16 %v58
    %v121 = vunpack.c.h.b16 %v58
    %v122 = vunpack.c.l.b16 %v59
    %v123 = vunpack.c.h.b16 %v59
    %v124 = vpack.c.b16 %v94, %v92
    %v125 = vpack.c.b16 %v95, %v93
    %v126 = vpack.c.b16 %v98, %v96
    %v127 = vpack.c.b16 %v99, %v97
    %v128 = vpack.c.b16 %v102, %v100
    %v129 = vpack.c.b16 %v103, %v101
    %v130 = vpack.c.b16 %v106, %v104
    %v131 = vpack.c.b16 %v107, %v105
    %v132 = vpack.c.b16 %v110, %v108
    %v133 = vpack.c.b16 %v111, %v109
    %v134 = vpack.c.b16 %v114, %v112
    %v135 = vpack.c.b16 %v115, %v113
    %v136 = vpack.c.b16 %v118, %v116
    %v137 = vpack.c.b16 %v119, %v117
    %v138 = vpack.c.b16 %v122, %v120
    %v139 = vpack.c.b16 %v123, %v121
    %156 = vmatprep.subr.bf16.mxu0 %v139
    %157 = vmatpush1.bf16.xpose.msra.mxu0 %v138
    %158 = vmatprep.subr.bf16.mxu0 %v137
    %159 = vmatpush1.bf16.xpose.msra.mxu0 %v136
    %160 = vmatprep.subr.bf16.mxu0 %v135
    %161 = vmatpush1.bf16.xpose.msra.mxu0 %v134
    %162 = vmatprep.subr.bf16.mxu0 %v133
    %163 = vmatpush1.bf16.xpose.msra.mxu0 %v132
    %164 = vmatprep.subr.bf16.mxu0 %v131
    %165 = vmatpush1.bf16.xpose.msra.mxu0 %v130
    %166 = vmatprep.subr.bf16.mxu0 %v129
    %167 = vmatpush1.bf16.xpose.msra.mxu0 %v128
    %168 = vmatprep.subr.bf16.mxu0 %v127
    %169 = vmatpush1.bf16.xpose.msra.mxu0 %v126
    %170 = vmatprep.subr.bf16.mxu0 %v125
    %171 = vmatpush1.bf16.xpose.msra.mxu0 %v124
    %172 = vmatprep.subr.bf16.mxu0 0
    %173 = vmatpush2.bf16.xpose.msra.mxu0 0
    %174 = vmatprep.subr.bf16.mxu0 0
    %175 = vmatpush2.bf16.xpose.msra.mxu0 0
    %176 = vmatprep.subr.bf16.mxu0 0
    %177 = vmatpush2.bf16.xpose.msra.mxu0 0
    %178 = vmatprep.subr.bf16.mxu0 0
    %179 = vmatpush2.bf16.xpose.msra.mxu0 0
    %180 = vmatprep.subr.bf16.mxu0 0
    %181 = vmatpush2.bf16.xpose.msra.mxu0 0
    %182 = vmatprep.subr.bf16.mxu0 0
    %183 = vmatpush2.bf16.xpose.msra.mxu0 0
    %184 = vmatprep.subr.bf16.mxu0 0
    %185 = vmatpush2.bf16.xpose.msra.mxu0 0
    %186 = vmatprep.subr.bf16.mxu0 0
    %187 = vmatpush2.bf16.xpose.msra.mxu0 0
    %188 = vmatprep.mubr.bf16.mxu0 %v125
    %189 = vmatmul.mubr.bf16.gmra.mxu0 %v124
    %v190 = vpop.f32.mrf.mxu0
    %v191 = vadd.f32 0.0, %v190
    %v192 = vpop.f32.mrf.mxu0
    %v193 = vpop.f32.mrf.mxu0
    %v194 = vadd.f32 0.0, %v193
    %v195 = vpop.f32.mrf.mxu0
    %196 = vmatprep.mubr.bf16.mxu0 %v127
    %197 = vmatmul.mubr.bf16.gmra.mxu0 %v126
    %v198 = vpop.f32.mrf.mxu0
    %v199 = vadd.f32 0.0, %v198
    %v200 = vpop.f32.mrf.mxu0
    %v201 = vpop.f32.mrf.mxu0
    %v202 = vadd.f32 0.0, %v201
    %v203 = vpop.f32.mrf.mxu0
    %204 = vmatprep.mubr.bf16.mxu0 %v129
    %205 = vmatmul.mubr.bf16.gmra.mxu0 %v128
    %v206 = vpop.f32.mrf.mxu0
    %v207 = vadd.f32 0.0, %v206
    %v208 = vpop.f32.mrf.mxu0
    %v209 = vpop.f32.mrf.mxu0
    %v210 = vadd.f32 0.0, %v209
    %v211 = vpop.f32.mrf.mxu0
    %212 = vmatprep.mubr.bf16.mxu0 %v131
    %213 = vmatmul.mubr.bf16.gmra.mxu0 %v130
    %v214 = vpop.f32.mrf.mxu0
    %v215 = vadd.f32 0.0, %v214
    %v216 = vpop.f32.mrf.mxu0
    %v217 = vpop.f32.mrf.mxu0
    %v218 = vadd.f32 0.0, %v217
    %v219 = vpop.f32.mrf.mxu0
    %220 = vmatprep.mubr.bf16.mxu0 %v133
    %221 = vmatmul.mubr.bf16.gmra.mxu0 %v132
    %v222 = vpop.f32.mrf.mxu0
    %v223 = vadd.f32 0.0, %v222
    %v224 = vpop.f32.mrf.mxu0
    %v225 = vpop.f32.mrf.mxu0
    %v226 = vadd.f32 0.0, %v225
    %v227 = vpop.f32.mrf.mxu0
    %228 = vmatprep.mubr.bf16.mxu0 %v135
    %229 = vmatmul.mubr.bf16.gmra.mxu0 %v134
    %v230 = vpop.f32.mrf.mxu0
    %v231 = vadd.f32 0.0, %v230
    %v232 = vpop.f32.mrf.mxu0
    %v233 = vpop.f32.mrf.mxu0
    %v234 = vadd.f32 0.0, %v233
    %v235 = vpop.f32.mrf.mxu0
    %236 = vmatprep.mubr.bf16.mxu0 %v137
    %237 = vmatmul.mubr.bf16.gmra.mxu0 %v136
    %v238 = vpop.f32.mrf.mxu0
    %v239 = vadd.f32 0.0, %v238
    %v240 = vpop.f32.mrf.mxu0
    %v241 = vpop.f32.mrf.mxu0
    %v242 = vadd.f32 0.0, %v241
    %v243 = vpop.f32.mrf.mxu0
    %244 = vmatprep.mubr.bf16.mxu0 %v139
    %245 = vmatmul.mubr.bf16.gmra.mxu0 %v138
    %v246 = vpop.f32.mrf.mxu0
    %v247 = vadd.f32 0.0, %v246
    %v248 = vpop.f32.mrf.mxu0
    %v249 = vpop.f32.mrf.mxu0
    %v250 = vadd.f32 0.0, %v249
    %v251 = vpop.f32.mrf.mxu0
    %252 = vdwg.mxu0
    %v253 = vadd.f32 %v60, %v191
    %v254 = vadd.f32 %v61, %v194
    %v255 = vadd.f32 %v62, %v199
    %v256 = vadd.f32 %v63, %v202
    %v257 = vadd.f32 %v64, %v207
    %v258 = vadd.f32 %v65, %v210
    %v259 = vadd.f32 %v66, %v215
    %v260 = vadd.f32 %v67, %v218
    %v261 = vadd.f32 %v68, %v223
    %v262 = vadd.f32 %v69, %v226
    %v263 = vadd.f32 %v70, %v231
    %v264 = vadd.f32 %v71, %v234
    %v265 = vadd.f32 %v72, %v239
    %v266 = vadd.f32 %v73, %v242
    %v267 = vadd.f32 %v74, %v247
    %v268 = vadd.f32 %v75, %v250
    %269 = vst [vmem:[#allocation2] sm:$0xff] %v253
    %270 = vst [vmem:[#allocation2 + $0x8] sm:$0xff] %v254
    %271 = vst [vmem:[#allocation2 + $0x10] sm:$0xff] %v255
    %272 = vst [vmem:[#allocation2 + $0x18] sm:$0xff] %v256
    %273 = vst [vmem:[#allocation2 + $0x20] sm:$0xff] %v257
    %274 = vst [vmem:[#allocation2 + $0x28] sm:$0xff] %v258
    %275 = vst [vmem:[#allocation2 + $0x30] sm:$0xff] %v259
    %276 = vst [vmem:[#allocation2 + $0x38] sm:$0xff] %v260
    %277 = vst [vmem:[#allocation2 + $0x40] sm:$0xff] %v261
    %278 = vst [vmem:[#allocation2 + $0x48] sm:$0xff] %v262
    %279 = vst [vmem:[#allocation2 + $0x50] sm:$0xff] %v263
    %280 = vst [vmem:[#allocation2 + $0x58] sm:$0xff] %v264
    %281 = vst [vmem:[#allocation2 + $0x60] sm:$0xff] %v265
    %282 = vst [vmem:[#allocation2 + $0x68] sm:$0xff] %v266
    %283 = vst [vmem:[#allocation2 + $0x70] sm:$0xff] %v267
    %284 = vst [vmem:[#allocation2 + $0x78] sm:$0xff] %v268
    // Predicated region
    $region14: #{tpu_custom_call.1} parent=1 // pred_check
      %p285 = pneg %p24
    $region15: #{tpu_custom_call.1} parent=1 // pred_check_branch
      %287 = sbr.rel (%p285) target = $region17
    $region16: #{tpu_custom_call.1} parent=1 // pred_region
      %v288 = vld [vmem:[#allocation2] sm:$0xff]
      %v289 = vld [vmem:[#allocation2 + $0x8] sm:$0xff]
      %v290 = vld [vmem:[#allocation2 + $0x10] sm:$0xff]
      %v291 = vld [vmem:[#allocation2 + $0x18] sm:$0xff]
      %v292 = vld [vmem:[#allocation2 + $0x20] sm:$0xff]
      %v293 = vld [vmem:[#allocation2 + $0x28] sm:$0xff]
      %v294 = vld [vmem:[#allocation2 + $0x30] sm:$0xff]
      %v295 = vld [vmem:[#allocation2 + $0x38] sm:$0xff]
      %v296 = vld [vmem:[#allocation2 + $0x40] sm:$0xff]
      %v297 = vld [vmem:[#allocation2 + $0x48] sm:$0xff]
      %v298 = vld [vmem:[#allocation2 + $0x50] sm:$0xff]
      %v299 = vld [vmem:[#allocation2 + $0x58] sm:$0xff]
      %v300 = vld [vmem:[#allocation2 + $0x60] sm:$0xff]
      %v301 = vld [vmem:[#allocation2 + $0x68] sm:$0xff]
      %v302 = vld [vmem:[#allocation2 + $0x70] sm:$0xff]
      %v303 = vld [vmem:[#allocation2 + $0x78] sm:$0xff]
      %v304 = vmul.f32 %v288, 0.00048828125
      %v305 = vmul.f32 %v289, 0.00048828125
      %v306 = vmul.f32 %v290, 0.00048828125
      %v307 = vmul.f32 %v291, 0.00048828125
      %v308 = vmul.f32 %v292, 0.00048828125
      %v309 = vmul.f32 %v293, 0.00048828125
      %v310 = vmul.f32 %v294, 0.00048828125
      %v311 = vmul.f32 %v295, 0.00048828125
      %v312 = vmul.f32 %v296, 0.00048828125
      %v313 = vmul.f32 %v297, 0.00048828125
      %v314 = vmul.f32 %v298, 0.00048828125
      %v315 = vmul.f32 %v299, 0.00048828125
      %v316 = vmul.f32 %v300, 0.00048828125
      %v317 = vmul.f32 %v301, 0.00048828125
      %v318 = vmul.f32 %v302, 0.00048828125
      %v319 = vmul.f32 %v303, 0.00048828125
      %320 = vst [vmem:[#allocation6] sm:$0xff] %v304
      %321 = vst [vmem:[#allocation6 + $0x8] sm:$0xff] %v305
      %322 = vst [vmem:[#allocation6 + $0x10] sm:$0xff] %v306
      %323 = vst [vmem:[#allocation6 + $0x18] sm:$0xff] %v307
      %324 = vst [vmem:[#allocation6 + $0x20] sm:$0xff] %v308
      %325 = vst [vmem:[#allocation6 + $0x28] sm:$0xff] %v309
      %326 = vst [vmem:[#allocation6 + $0x30] sm:$0xff] %v310
      %327 = vst [vmem:[#allocation6 + $0x38] sm:$0xff] %v311
      %328 = vst [vmem:[#allocation6 + $0x40] sm:$0xff] %v312
      %329 = vst [vmem:[#allocation6 + $0x48] sm:$0xff] %v313
      %330 = vst [vmem:[#allocation6 + $0x50] sm:$0xff] %v314
      %331 = vst [vmem:[#allocation6 + $0x58] sm:$0xff] %v315
      %332 = vst [vmem:[#allocation6 + $0x60] sm:$0xff] %v316
      %333 = vst [vmem:[#allocation6 + $0x68] sm:$0xff] %v317
      %334 = vst [vmem:[#allocation6 + $0x70] sm:$0xff] %v318
      %335 = vst [vmem:[#allocation6 + $0x78] sm:$0xff] %v319
    $region17: #{tpu_custom_call.1} parent=1 // pred_fallthru
      _
    // Predicated region
    $region18: #{tpu_custom_call.1} parent=1 // pred_check
      _
    $region19: #{tpu_custom_call.1} parent=1 // pred_check_branch
      %337 = sbr.rel (0) target = $region21
    $region20: #{tpu_custom_call.1} parent=1 // pred_region
      %s339 = ssub.s32 2048, 2048
      %340 = vsyncadd [#allocation5], %s339
      %s341 = sshll.u32 [#allocation6], 4
      %s342 = int_to_ptr.vmem [resolvable:$true] %s341
      %347 = dma.vmem_to_hbm [thread:$0]  %s342, 2048, %s1, [#allocation5], 128, 128, 8
    $region21: #{tpu_custom_call.1} parent=1 // pred_fallthru
      _
    // Predicated region
    $region22: #{tpu_custom_call.1} parent=1 // pred_check
      _
    $region23: #{tpu_custom_call.1} parent=1 // pred_check_branch
      %349 = sbr.rel (0) target = $region25
    $region24: #{tpu_custom_call.1} parent=1 // pred_region
      %350 = dma.done [#allocation5], 2048
    $region25: #{tpu_custom_call.1} parent=1 // pred_fallthru
      _
    %351 = vsyncpa [#allocation4], 1
    %352 = vsyncpa [#allocation5], 1

</llo_original>
